<compile_context>
chip_gen: v5e
topology: v5e:2x2
jax: 0.10.0
libtpu: 0.0.40
codegen_flags: <defaults>
</compile_context>

<pallas_src>
import functools

import jax
import jax.numpy as jnp
from jax import lax
from jax.experimental import pallas as pl
from jax.experimental.pallas import tpu as pltpu

LANES = 128
DEFAULT_BLOCK_ROWS = 1024  # (1024,128) f32 block = 512 KiB


def _cdiv(a, b):
    return -(-a // b)


def _bce_kernel(x_ref, t_ref, out_ref, acc_ref, *,
                n_full_tiles, tail, tiles_per_core, smoothing):
    p = pl.program_id(0)           # parallel (megacore) axis
    k = pl.program_id(1)           # reduction axis (arbitrary)
    rt = p * tiles_per_core + k    # logical row-tile index

    @pl.when(k == 0)
    def _init():
        acc_ref[...] = jnp.zeros_like(acc_ref)

    x = x_ref[...].astype(jnp.float32)
    t = t_ref[...].astype(jnp.float32)

    # symmetric label smoothing on dense multi-label targets
    t = t * (1.0 - smoothing) + 0.5 * smoothing

    # numerically-stable BCE with logits: max(x,0) - x*t + log(1 + exp(-|x|))
    loss = jnp.maximum(x, 0.0) - x * t + jnp.log1p(jnp.exp(-jnp.abs(x)))

    # Fully-valid tiles: plain elementwise accumulate (no mask math).
    @pl.when(rt < n_full_tiles)
    def _full():
        acc_ref[...] += loss

    if tail > 0:  # trace-time: a ragged tail tile exists
        @pl.when(rt == n_full_tiles)   # the single partially-valid tile
        def _partial():
            bm, ln = acc_ref.shape
            r = lax.broadcasted_iota(jnp.int32, (bm, ln), 0)
            c = lax.broadcasted_iota(jnp.int32, (bm, ln), 1)
            lidx = r * ln + c          # local index within this tile (< 2^31)
            acc_ref[...] += jnp.where(lidx < tail, loss, 0.0)

    # tiles with rt > n_full_tiles (clamped grid padding) contribute nothing

    @pl.when(k == pl.num_programs(1) - 1)
    def _finalize():
        out_ref[...] = jnp.sum(acc_ref[...]).reshape(1, 1, 1)


def mul_bce(logits, labels, label_smoothing=0.1, reduction="mean",
            block_rows=DEFAULT_BLOCK_ROWS, num_parallel=2):
    """Pallas equivalent of MulBCE.forward(logits, labels)."""
    # TODO(synk): reduction='none' (per-element loss output) is not implemented.
    if reduction not in ("mean", "sum"):
        raise NotImplementedError(f"unsupported reduction: {reduction}")

    x = logits.reshape(-1)
    t = labels.reshape(-1)
    assert x.shape == t.shape, "flattened logits/labels must match in size"
    n = x.shape[0]

    # Pad only to a lane multiple; keep native dtype (kernel casts per tile).
    n128 = _cdiv(n, LANES) * LANES
    if n128 != n:
        x = jnp.pad(x, (0, n128 - n))
        t = jnp.pad(t, (0, n128 - n))
    rows = n128 // LANES
    x = x.reshape(rows, LANES)
    t = t.reshape(rows, LANES)

    block_rows = max(8, (block_rows // 8) * 8)
    bm = rows if rows <= block_rows else block_rows   # full-dim or multiple of 8
    num_tiles = _cdiv(rows, bm)

    # Parallel split for megacore (v7x); harmless serial loop on v5e/v6e.
    P = max(1, min(num_parallel, num_tiles))
    tiles_per_core = _cdiv(num_tiles, P)

    tile_elems = bm * LANES
    n_full_tiles = n // tile_elems
    tail = n - n_full_tiles * tile_elems

    def in_idx(p, k):
        rt = p * tiles_per_core + k
        if P * tiles_per_core > num_tiles:
            rt = jnp.minimum(rt, num_tiles - 1)  # padded grid cells; masked anyway
        return (rt, 0)

    kernel = functools.partial(
        _bce_kernel,
        n_full_tiles=n_full_tiles,
        tail=tail,
        tiles_per_core=tiles_per_core,
        smoothing=float(label_smoothing),
    )

    partials = pl.pallas_call(
        kernel,
        out_shape=jax.ShapeDtypeStruct((P, 1, 1), jnp.float32),
        grid=(P, tiles_per_core),
        in_specs=[
            pl.BlockSpec((bm, LANES), in_idx),
            pl.BlockSpec((bm, LANES), in_idx),
        ],
        out_specs=pl.BlockSpec((1, 1, 1), lambda p, k: (p, 0, 0)),
        scratch_shapes=[pltpu.VMEM((bm, LANES), jnp.float32)],
        compiler_params=pltpu.CompilerParams(
            dimension_semantics=("parallel", "arbitrary"),
        ),
    )(x, t)

    total = jnp.sum(partials)
    if reduction == "mean":
        return total / jnp.float32(n)
    return total


def _reference(logits, labels, label_smoothing=0.1, reduction="mean"):
    x = logits.reshape(-1).astype(jnp.float32)
    t = labels.reshape(-1).astype(jnp.float32)
    t = t * (1.0 - label_smoothing) + 0.5 * label_smoothing
    loss = jnp.maximum(x, 0.0) - x * t + jnp.log1p(jnp.exp(-jnp.abs(x)))
    return loss.mean() if reduction == "mean" else loss.sum()


if __name__ == "__main__":
    key = jax.random.PRNGKey(0)
    k1, k2, k3, k4 = jax.random.split(key, 4)

    # Small multi-label setup: logits (batch=8, classes=32); labels in {0,1}.
    logits = jax.random.normal(k1, (8, 32), dtype=jnp.float32)
    labels = jax.random.bernoulli(k2, p=0.3, shape=(8, 32)).astype(jnp.float32)

    loss = jax.block_until_ready(mul_bce(logits, labels, 0.1, "mean"))
    ref = _reference(logits, labels, 0.1, "mean")
    assert jnp.allclose(loss, ref, rtol=1e-5, atol=1e-5), (loss, ref)

    # Ragged bf16 case: exercises native-dtype streaming, the tail mask and
    # the 2-way parallel (megacore) split across row tiles.
    logits2 = jax.random.normal(k3, (300, 513), dtype=jnp.bfloat16)
    labels2 = jax.random.bernoulli(k4, p=0.2, shape=(300, 513)).astype(jnp.bfloat16)
    loss2 = jax.block_until_ready(mul_bce(logits2, labels2, 0.1, "mean"))
    ref2 = _reference(logits2, labels2, 0.1, "mean")
    assert jnp.allclose(loss2, ref2, rtol=1e-4, atol=1e-5), (loss2, ref2)

    print("KERNEL_OK")
</pallas_src>

<mosaic_0001>
module attributes {stable_mosaic.version = 11 : i64} {
  func.func @_bce_kernel(%arg0: i32, %arg1: i32, %arg2: memref<2x128xf32, #tpu.memory_space<vmem>>, %arg3: memref<2x128xf32, #tpu.memory_space<vmem>>, %arg4: memref<1x1x1xf32, #tpu.memory_space<vmem>>, %arg5: memref<2x128xf32, #tpu.memory_space<vmem>>) attributes {dimension_semantics = [#tpu.dimension_semantics<parallel>, #tpu.dimension_semantics<arbitrary>], iteration_bounds = array<i64: 1, 1>, scalar_prefetch = 0 : i64, scratch_operands = 1 : i64, tpu.core_type = #tpu.core_type<tc>, window_params = [{transform_indices = @transform_0, window_bounds = array<i64: 2, 128>}, {transform_indices = @transform_1, window_bounds = array<i64: 2, 128>}, {transform_indices = @transform_2, window_bounds = array<i64: 1, 1, 1>}]} {
    %c1_i32 = arith.constant 1 : i32
    %0 = arith.muli %arg0, %c1_i32 : i32
    %1 = arith.addi %0, %arg1 : i32
    %c0_i32 = arith.constant 0 : i32
    %2 = arith.cmpi eq, %arg1, %c0_i32 : i32
    %3 = arith.extui %2 : i1 to i32
    %c0_i32_0 = arith.constant 0 : i32
    %4 = arith.cmpi ne, %3, %c0_i32_0 : i32
    scf.if %4 {
      %cst_11 = arith.constant 0.000000e+00 : f32
      %27 = vector.broadcast %cst_11 : f32 to vector<2x128xf32>
      %c0_12 = arith.constant 0 : index
      %c0_13 = arith.constant 0 : index
      %28 = vector.load %arg5[%c0_12, %c0_13] : memref<2x128xf32, #tpu.memory_space<vmem>>, vector<2x128xf32>
      tpu.vector_store %arg5[%c0_12, %c0_13], %27 {strides = array<i32>} : memref<2x128xf32, #tpu.memory_space<vmem>>, vector<2x128xf32>,
    } else {
    }
    %c0 = arith.constant 0 : index
    %c0_1 = arith.constant 0 : index
    %5 = vector.load %arg2[%c0, %c0_1] : memref<2x128xf32, #tpu.memory_space<vmem>>, vector<2x128xf32>
    %c0_2 = arith.constant 0 : index
    %c0_3 = arith.constant 0 : index
    %6 = vector.load %arg3[%c0_2, %c0_3] : memref<2x128xf32, #tpu.memory_space<vmem>>, vector<2x128xf32>
    %cst = arith.constant 0.899999976 : f32
    %7 = vector.broadcast %cst : f32 to vector<2x128xf32>
    %8 = arith.mulf %6, %7 : vector<2x128xf32>
    %cst_4 = arith.constant 5.000000e-02 : f32
    %9 = vector.broadcast %cst_4 : f32 to vector<2x128xf32>
    %10 = arith.addf %8, %9 : vector<2x128xf32>
    %cst_5 = arith.constant 0.000000e+00 : f32
    %11 = vector.broadcast %cst_5 : f32 to vector<2x128xf32>
    %12 = arith.maximumf %5, %11 : vector<2x128xf32>
    %13 = arith.mulf %5, %10 : vector<2x128xf32>
    %14 = arith.subf %12, %13 : vector<2x128xf32>
    %15 = math.absf %5 : vector<2x128xf32>
    %cst_6 = arith.constant 0.000000e+00 : f32
    %16 = vector.broadcast %cst_6 : f32 to vector<2x128xf32>
    %17 = arith.subf %16, %15 : vector<2x128xf32>
    %18 = math.exp %17 : vector<2x128xf32>
    %19 = math.log1p %18 : vector<2x128xf32>
    %20 = arith.addf %14, %19 : vector<2x128xf32>
    %c1_i32_7 = arith.constant 1 : i32
    %21 = arith.cmpi slt, %1, %c1_i32_7 : i32
    %22 = arith.extui %21 : i1 to i32
    %c0_i32_8 = arith.constant 0 : i32
    %23 = arith.cmpi ne, %22, %c0_i32_8 : i32
    scf.if %23 {
      %c0_11 = arith.constant 0 : index
      %c0_12 = arith.constant 0 : index
      %27 = vector.load %arg5[%c0_11, %c0_12] : memref<2x128xf32, #tpu.memory_space<vmem>>, vector<2x128xf32>
      %28 = arith.addf %27, %20 : vector<2x128xf32>
      %c0_13 = arith.constant 0 : index
      %c0_14 = arith.constant 0 : index
      %29 = vector.load %arg5[%c0_13, %c0_14] : memref<2x128xf32, #tpu.memory_space<vmem>>, vector<2x128xf32>
      tpu.vector_store %arg5[%c0_13, %c0_14], %28 {strides = array<i32>} : memref<2x128xf32, #tpu.memory_space<vmem>>, vector<2x128xf32>,
    } else {
    }
    %c0_i32_9 = arith.constant 0 : i32
    %24 = arith.cmpi eq, %arg1, %c0_i32_9 : i32
    %25 = arith.extui %24 : i1 to i32
    %c0_i32_10 = arith.constant 0 : i32
    %26 = arith.cmpi ne, %25, %c0_i32_10 : i32
    scf.if %26 {
      %c0_11 = arith.constant 0 : index
      %c0_12 = arith.constant 0 : index
      %27 = vector.load %arg5[%c0_11, %c0_12] : memref<2x128xf32, #tpu.memory_space<vmem>>, vector<2x128xf32>
      %28 = vector.shape_cast %27 : vector<2x128xf32> to vector<1x2x128xf32>
      %cst_13 = arith.constant dense<0.000000e+00> : vector<1xf32>
      %29 = vector.multi_reduction <add>, %28, %cst_13 [1, 2] : vector<1x2x128xf32> to vector<1xf32>
      %30 = vector.shape_cast %29 : vector<1xf32> to vector<1x1x1xf32>
      %31 = vector.extract %30[0, 0, 0] : f32 from vector<1x1x1xf32>
      %32 = vector.broadcast %31 : f32 to vector<1x1x1xf32>
      %c0_14 = arith.constant 0 : index
      %c0_15 = arith.constant 0 : index
      %c0_16 = arith.constant 0 : index
      %33 = vector.load %arg4[%c0_14, %c0_15, %c0_16] : memref<1x1x1xf32, #tpu.memory_space<vmem>>, vector<1x1x1xf32>
      tpu.vector_store %arg4[%c0_14, %c0_15, %c0_16], %32 {strides = array<i32>} : memref<1x1x1xf32, #tpu.memory_space<vmem>>, vector<1x1x1xf32>,
    } else {
    }
    return
  }
  func.func @transform_0(%arg0: i32, %arg1: i32) -> (i32, i32) {
    %c1_i32 = arith.constant 1 : i32
    %0 = arith.muli %arg0, %c1_i32 : i32
    %1 = arith.addi %0, %arg1 : i32
    %c0_i32 = arith.constant 0 : i32
    %c0_i32_0 = arith.constant 0 : i32
    return %1, %c0_i32 : i32, i32
  }
  func.func @transform_1(%arg0: i32, %arg1: i32) -> (i32, i32) {
    %c1_i32 = arith.constant 1 : i32
    %0 = arith.muli %arg0, %c1_i32 : i32
    %1 = arith.addi %0, %arg1 : i32
    %c0_i32 = arith.constant 0 : i32
    %c0_i32_0 = arith.constant 0 : i32
    return %1, %c0_i32 : i32, i32
  }
  func.func @transform_2(%arg0: i32, %arg1: i32) -> (i32, i32, i32) {
    %c0_i32 = arith.constant 0 : i32
    %c0_i32_0 = arith.constant 0 : i32
    %c0_i32_1 = arith.constant 0 : i32
    return %arg0, %c0_i32, %c0_i32_0 : i32, i32, i32
  }
}

</mosaic_0001>

<llo_original>
// kernel: tpu_custom_call.1
$region0: #{tpu_custom_call.1}
  #allocation0 [shape = 'u32[]', space=smem, size = 0x4, offset = 0x4, fixed_abs, tag = 'smem constant byte address 0x4 - core index']
  #allocation1 [shape = 'u32[72,128]{1,0:T(1,128)}', space=vmem, size = 0x9000, scoped, tag = 'internal scratch']
  #allocation2 [shape = 'f32[2,128]{1,0:T(2,128)}', space=vmem, size = 0x400, scoped, tag = 'scratch operand']
  %s0 = inlined_call_operand.hbm [shape: f32[2,128], index: 0, kind: input, shape index: {}]
  %s1 = inlined_call_operand.hbm [shape: f32[2,128], index: 1, kind: input, shape index: {}]
  %s2 = inlined_call_operand.hbm [shape: f32[1,1,1], index: 2, kind: output, shape index: {}]
  %s3 = sld [smem:[#allocation0]]
  $region38: #{tpu_custom_call.1} parent=0
    _
  %s5 = ssub.s32 1, %s3
  %s6 = scalar_select 0, %s5, %s3
  $region1: #{tpu_custom_call.1} parent=0
    #allocation3 [shape = 'u8[1024]{0}', space=vmem, size = 0x400, scoped, tag = 'input window, operand 0, single buffered']
    #allocation4 [shape = 's32[1]{0}', space=sflag, size = 0x4, scoped, tag = 'scoped memory for tpu_custom_call.1']
    #allocation5 [shape = 's32[1]{0}', space=sflag, size = 0x4, scoped, tag = 'scoped memory for tpu_custom_call.1']
    #allocation6 [shape = 'u8[1024]{0}', space=vmem, size = 0x400, scoped, tag = 'input window, operand 1, single buffered']
    #allocation7 [shape = 's32[1]{0}', space=sflag, size = 0x4, scoped, tag = 'scoped memory for tpu_custom_call.1']
    #allocation8 [shape = 'u8[512]{0}', space=vmem, size = 0x400, scoped, tag = 'output window, operand 0, single buffered']
    %7 = vsyncpa [#allocation4], 0
    %8 = vsyncpa [#allocation7], 0
    %9 = vsyncpa [#allocation5], 0
    // Predicated region
    $region2: #{tpu_custom_call.1} parent=1 // pred_check
      _
    $region3: #{tpu_custom_call.1} parent=1 // pred_check_branch
      %11 = sbr.rel (0) target = $region5
    $region4: #{tpu_custom_call.1} parent=1 // pred_region
      %s12 = sadd.s32 0, 0
      %14 = vsyncadd [#allocation4], 0
      %s15 = smul.addr %s12, 2
      %s16 = scalar_lea.hbm %s0, %s15
      %s18 = sshll.u32 %s16, 4
      %s19 = int_to_ptr.hbm [resolvable:$true] %s18
      %s20 = sshll.u32 [#allocation3], 4
      %s21 = int_to_ptr.vmem [resolvable:$true] %s20
      %23 = dma.hbm_to_vmem [thread:$0]  %s19, 32, %s21, [#allocation4]
    $region5: #{tpu_custom_call.1} parent=1 // pred_fallthru
      _
    // Predicated region
    $region6: #{tpu_custom_call.1} parent=1 // pred_check
      _
    $region7: #{tpu_custom_call.1} parent=1 // pred_check_branch
      %25 = sbr.rel (0) target = $region9
    $region8: #{tpu_custom_call.1} parent=1 // pred_region
      %s26 = sadd.s32 0, 0
      %28 = vsyncadd [#allocation7], 0
      %s29 = smul.addr %s26, 2
      %s30 = scalar_lea.hbm %s1, %s29
      %s32 = sshll.u32 %s30, 4
      %s33 = int_to_ptr.hbm [resolvable:$true] %s32
      %s34 = sshll.u32 [#allocation6], 4
      %s35 = int_to_ptr.vmem [resolvable:$true] %s34
      %37 = dma.hbm_to_vmem [thread:$0]  %s33, 32, %s35, [#allocation7]
    $region9: #{tpu_custom_call.1} parent=1 // pred_fallthru
      _
    // Predicated region
    $region10: #{tpu_custom_call.1} parent=1 // pred_check
      _
    $region11: #{tpu_custom_call.1} parent=1 // pred_check_branch
      %39 = sbr.rel (0) target = $region13
    $region12: #{tpu_custom_call.1} parent=1 // pred_region
      %41 = dma.done [#allocation4], 32
    $region13: #{tpu_custom_call.1} parent=1 // pred_fallthru
      _
    // Predicated region
    $region14: #{tpu_custom_call.1} parent=1 // pred_check
      _
    $region15: #{tpu_custom_call.1} parent=1 // pred_check_branch
      %43 = sbr.rel (0) target = $region17
    $region16: #{tpu_custom_call.1} parent=1 // pred_region
      %45 = dma.done [#allocation7], 32
    $region17: #{tpu_custom_call.1} parent=1 // pred_fallthru
      _
    %s46 = sadd.s32 0, 0
    %s47 = sadd.s32 0, 0
    %s48 = sadd.s32 0, 0
    %p49 = scmp.eq.s32.totalorder 0, 0
    // Predicated region
    $region18: #{tpu_custom_call.1} parent=1 // pred_check
      %p50 = pneg %p49
    $region19: #{tpu_custom_call.1} parent=1 // pred_check_branch
      %52 = sbr.rel (%p50) target = $region21
    $region20: #{tpu_custom_call.1} parent=1 // pred_region
      %53 = vst [vmem:[#allocation2] sm:$0x3] 0.0
    $region21: #{tpu_custom_call.1} parent=1 // pred_fallthru
      _
    %v54 = vld [vmem:[#allocation3] sm:$0x3]
    %v55 = vld [vmem:[#allocation6] sm:$0x3]
    %v56 = vmul.f32 %v55, 0.9
    %v57 = vadd.f32 %v56, 0.05
    %v58 = vmax.f32 %v54, 0.0
    %v59 = vmul.f32 %v54, %v57
    %v60 = vsub.f32 %v58, %v59
    %v61 = vand.u32 2147483647, %v54
    %v62 = vsub.f32 0.0, %v61
    %v63 = vmul.f32 %v62, 1.442695
    %v64 = vpow.pop %v63
    %v65 = vadd.f32 %v64, 1.0
    %v66 = vlog2.pop %v65
    %v67 = vmul.f32 %v66, 0.6931472
    %v68 = vmul.f32 -0.5, %v64
    %v69 = vadd.f32 %v68, 1.0
    %v70 = vmul.f32 %v69, %v64
    %v71 = vand.u32 2147483647, %v64
    %vm72 = vcmp.lt.f32.partialorder %v71, 0.0004427343
    %v73 = vsel %vm72, %v70, %v67
    %v74 = vadd.f32 %v60, %v73
    %p75 = scmp.lt.s32.totalorder %s48, 1
    // Predicated region
    $region22: #{tpu_custom_call.1} parent=1 // pred_check
      %p76 = pneg %p75
    $region23: #{tpu_custom_call.1} parent=1 // pred_check_branch
      %78 = sbr.rel (%p76) target = $region25
    $region24: #{tpu_custom_call.1} parent=1 // pred_region
      %v79 = vld [vmem:[#allocation2] sm:$0x3]
      %v80 = vadd.f32 %v79, %v74
      %81 = vst [vmem:[#allocation2] sm:$0x3] %v80
    $region25: #{tpu_custom_call.1} parent=1 // pred_fallthru
      _
    // Predicated region
    $region26: #{tpu_custom_call.1} parent=1 // pred_check
      %p82 = pneg %p49
    $region27: #{tpu_custom_call.1} parent=1 // pred_check_branch
      %84 = sbr.rel (%p82) target = $region29
    $region28: #{tpu_custom_call.1} parent=1 // pred_region
      %v85 = vld [vmem:[#allocation2] sm:$0x3]
      %vm86 = vcmask 1041408
      %v87 = vsel %vm86, %v85, 0.0
      %88 = vadd.xlane.f32.xlu0 %v87
      %v89 = vpop.xlane.xlu0 %88
      %v90 = vrot.slane %v89, 4
      %v91 = vadd.f32 %v89, %v90
      %v92 = vrot.slane %v91, 2
      %v93 = vadd.f32 %v91, %v92
      %v94 = vrot.slane %v93, 1
      %v95 = vadd.f32 %v93, %v94
      %s96 = vtos %v95
      %v97 = vstv %s96
      %vm98 = vcmask 0
      %99 = vst.msk [vmem:[#allocation8] sm:$0x1] %vm98, %v97
    $region29: #{tpu_custom_call.1} parent=1 // pred_fallthru
      _
    // Predicated region
    $region30: #{tpu_custom_call.1} parent=1 // pred_check
      _
    $region31: #{tpu_custom_call.1} parent=1 // pred_check_branch
      %101 = sbr.rel (0) target = $region33
    $region32: #{tpu_custom_call.1} parent=1 // pred_region
      %103 = vsyncadd [#allocation5], 0
      %s105 = sshll.u32 [#allocation8], 4
      %s106 = int_to_ptr.vmem [resolvable:$true] %s105
      %s107 = sshll.u32 %s2, 4
      %s108 = int_to_ptr.hbm [resolvable:$true] %s107
      %110 = dma.vmem_to_hbm [thread:$0]  %s106, 16, %s108, [#allocation5]
    $region33: #{tpu_custom_call.1} parent=1 // pred_fallthru
      _
    // Predicated region
    $region34: #{tpu_custom_call.1} parent=1 // pred_check
      _
    $region35: #{tpu_custom_call.1} parent=1 // pred_check_branch
      %112 = sbr.rel (0) target = $region37
    $region36: #{tpu_custom_call.1} parent=1 // pred_region
      %114 = dma.done [#allocation5], 16
    $region37: #{tpu_custom_call.1} parent=1 // pred_fallthru
      _
    %115 = vsyncpa [#allocation4], 1
    %116 = vsyncpa [#allocation7], 1
    %117 = vsyncpa [#allocation5], 1

</llo_original>
